<compile_context>
chip_gen: v7x
topology: tpu7x:2x2x1
jax: 0.10.0
libtpu: 0.0.40
codegen_flags: <defaults>
</compile_context>

<pallas_src>
import numpy as np

import jax
import jax.numpy as jnp
from jax.experimental import pallas as pl
from jax.experimental.pallas import tpu as pltpu

# ----------------------------------------------------------------------------
# Config (mirrors the PyTorch `config` object used in __init__)
# ----------------------------------------------------------------------------
KMER = 9          # sequence length (must be odd)
K1 = 3            # kernel_size_conv1 (odd)
K2 = 3            # kernel_size_conv2 (odd)
KP = 2            # kernel_size_maxpool
C1 = 8            # out_channels_conv1
C2 = 16           # out_channels_conv2
F1 = 32           # fc1_neurons
F2 = 16           # fc2_neurons
N_CT = 4          # n_ct (number of classes)
BATCH = 2

CEIL_MODE = (KMER == 3)   # False for KMER=9 -> floor-mode pooling
assert not CEIL_MODE, "this script implements floor-mode pooling (kmer != 3)"

PAD1 = (K1 - 1) // 2
PAD2 = (K2 - 1) // 2
L_CONV1 = KMER + 2 * PAD1 - K1 + 1          # = 9  ("same" conv)
L_POOL1 = (L_CONV1 - KP) // KP + 1          # = 4
L_CONV2 = L_POOL1 + 2 * PAD2 - K2 + 1       # = 4
L_POOL2 = (L_CONV2 - KP) // KP + 1          # = 2
FLATTEN = C2 * L_POOL2                      # = 32

# Flattened (lane-axis) widths of each stage, position-major (index = pos*C + c)
D_IN = KMER * 4                 # 36  : flattened network input
D_C1 = L_CONV1 * C1             # 72  : conv1 output
D_M1 = (L_CONV1 - 1) * C1       # 64  : maxpool1 scratch (slots 0..L_CONV1-2)
D_C2 = L_CONV2 * C2             # 64  : conv2 output
D_M2 = (L_CONV2 - 1) * C2       # 48  : maxpool2 scratch
D_OUT = N_CT + F2               # 20  : merged [logits | embedding] width

SLAB_LANES = 128                # lane-dense slab / output width
ALIGN = 16                      # bf16 sublane tile height


def _align(n, a=ALIGN):
    return -(-n // a) * a


# Row offsets of each parameter inside the single packed bf16 weight slab
# (16-aligned so every in-kernel slice starts on a packed-sublane-tile boundary)
R_W1 = 0
R_W2 = R_W1 + _align(D_IN)      # 48
R_W3 = R_W2 + _align(D_M1)      # 112
R_W4 = R_W3 + _align(D_M2)      # 160
R_W5 = R_W4 + _align(F1)        # 192
R_B1 = R_W5 + _align(F2)        # 208
R_B2 = R_B1 + ALIGN             # 224
R_B3 = R_B2 + ALIGN             # 240
R_B4 = R_B3 + ALIGN             # 256
R_B5 = R_B4 + ALIGN             # 272
SLAB_ROWS = _align(R_B5 + 1)    # 288


# ----------------------------------------------------------------------------
# Pallas kernel: 5 batched matmuls (bf16 MXU, f32 acc), 2 pooling maxes,
# one full (8, 128) lane-dense output store.
# ----------------------------------------------------------------------------
def _cnn_dna_kernel(x_ref, slab_ref, out_ref):
    f32, bf16 = jnp.float32, jnp.bfloat16
    x = x_ref[...]                                             # (Bp, 36) f32

    # Static slices of the packed bf16 weight slab (free).
    w1 = slab_ref[R_W1:R_W1 + D_IN, 0:D_C1]                    # (36, 72)
    w2 = slab_ref[R_W2:R_W2 + D_M1, 0:D_C2]                    # (64, 64)
    w3 = slab_ref[R_W3:R_W3 + D_M2, 0:F1]                      # (48, 32)
    w4 = slab_ref[R_W4:R_W4 + F1, 0:F2]                        # (32, 16)
    w5 = slab_ref[R_W5:R_W5 + F2, :]                           # (16, 128) [fc3.T | I | 0]
    b1 = slab_ref[R_B1:R_B1 + 1, 0:D_C1].astype(f32)           # (1, 72)
    b2 = slab_ref[R_B2:R_B2 + 1, 0:D_C2].astype(f32)           # (1, 64)
    b3 = slab_ref[R_B3:R_B3 + 1, 0:F1].astype(f32)             # (1, 32)
    b4 = slab_ref[R_B4:R_B4 + 1, 0:F2].astype(f32)             # (1, 16)
    b5 = slab_ref[R_B5:R_B5 + 1, :].astype(f32)                # (1, 128) [bfc3 | 0]

    # conv1 + ReLU : one batched matmul (zero padding folded into w1).
    h1 = jnp.maximum(
        jnp.dot(x.astype(bf16), w1, preferred_element_type=f32) + b1, 0.0)    # (Bp, 72)
    # maxpool1 (k=2, s=2, floor): element-wise max of two static lane slices.
    # Odd position-slots of m1 are garbage, killed by zeroed rows of w2.
    m1 = jnp.maximum(h1[:, 0:D_M1], h1[:, C1:C1 + D_M1])                       # (Bp, 64)
    # conv2 + ReLU (padding + pooled-slot selection folded into w2).
    h2 = jnp.maximum(
        jnp.dot(m1.astype(bf16), w2, preferred_element_type=f32) + b2, 0.0)   # (Bp, 64)
    # maxpool2
    m2 = jnp.maximum(h2[:, 0:D_M2], h2[:, C2:C2 + D_M2])                       # (Bp, 48)
    # fc1 + ReLU (PyTorch channel-major flatten folded into w3); dropout = identity.
    z1 = jnp.maximum(
        jnp.dot(m2.astype(bf16), w3, preferred_element_type=f32) + b3, 0.0)   # (Bp, 32)
    # fc2 + ReLU ; dropout = identity.
    emb = jnp.maximum(
        jnp.dot(z1.astype(bf16), w4, preferred_element_type=f32) + b4, 0.0)   # (Bp, 16)
    # fc3 + identity-passthrough of emb, fused into one augmented matmul:
    # out lanes [0:4] = logits, [4:20] = embedding, [20:128] = 0.
    out_ref[...] = jnp.dot(emb.astype(bf16), w5, preferred_element_type=f32) + b5


# ----------------------------------------------------------------------------
# One-time parameter folding / slab packing (pure NumPy, off the call path)
# ----------------------------------------------------------------------------
def _conv_as_matrix_np(w, l_out, pad, src_slots, n_slots):
    """Fold a 'same' Conv1d into a dense matmul matrix.

    w: (Cout, Cin, K).  The flattened input vector has `n_slots` position slots
    of Cin lanes each (lane index = slot*Cin + c); source position p of the
    conv lives in slot src_slots[p]; out-of-range positions are implicit zeros.
    Output lane index is l*Cout + o.  Returns (n_slots*Cin, l_out*Cout).
    """
    cout, cin, k = w.shape
    n_src = len(src_slots)
    p = np.arange(n_src)[:, None, None]
    l = np.arange(l_out)[None, :, None]
    kk = np.arange(k)[None, None, :]
    sel = (p == l + kk - pad).astype(np.float32)                 # (n_src, l_out, K)
    wb = np.einsum("plk,ock->pclo", sel, w.astype(np.float32))
    wb = wb.reshape(n_src, cin, l_out * cout)
    big = np.zeros((n_slots, cin, l_out * cout), np.float32)
    big[np.asarray(src_slots)] = wb
    return big.reshape(n_slots * cin, l_out * cout)


def _fc1_as_matrix_np(wfc1, n_slots, src_slots):
    """Fold fc1 (which consumes PyTorch's channel-major flatten of the pooled
    (C2, L_POOL2) map) into a matrix over the maxpool-2 scratch layout
    (lane index = slot*C2 + c)."""
    w = wfc1.astype(np.float32).reshape(F1, C2, L_POOL2)   # flatten index c*L2 + q
    w = np.transpose(w, (2, 1, 0))                         # (q, c, F1)
    big = np.zeros((n_slots, C2, F1), np.float32)
    big[np.asarray(src_slots)] = w
    return big.reshape(n_slots * C2, F1)


def pack_slab(params):
    """Build the (SLAB_ROWS, 128) bf16 weight slab ONCE per parameter set."""
    p = {k: np.asarray(v, dtype=np.float32) for k, v in params.items()}

    w1big = _conv_as_matrix_np(p["w1"], L_CONV1, PAD1,
                               src_slots=list(range(KMER)), n_slots=KMER)
    w2big = _conv_as_matrix_np(p["w2"], L_CONV2, PAD2,
                               src_slots=[KP * q for q in range(L_POOL1)],
                               n_slots=L_CONV1 - 1)
    w3big = _fc1_as_matrix_np(p["wfc1"], n_slots=L_CONV2 - 1,
                              src_slots=[KP * q for q in range(L_POOL2)])
    w4big = p["wfc2"].T                                          # (F1, F2)
    # Augmented final matmul: [fc3.T | I_F2 | 0] -> merged [logits | emb | 0] output.
    w5aug = np.zeros((F2, SLAB_LANES), np.float32)
    w5aug[:, 0:N_CT] = p["wfc3"].T
    w5aug[:, N_CT:N_CT + F2] = np.eye(F2, dtype=np.float32)
    b5aug = np.zeros((SLAB_LANES,), np.float32)
    b5aug[0:N_CT] = p["bfc3"]

    slab = np.zeros((SLAB_ROWS, SLAB_LANES), np.float32)
    slab[R_W1:R_W1 + D_IN, 0:D_C1] = w1big
    slab[R_W2:R_W2 + D_M1, 0:D_C2] = w2big
    slab[R_W3:R_W3 + D_M2, 0:F1] = w3big
    slab[R_W4:R_W4 + F1, 0:F2] = w4big
    slab[R_W5:R_W5 + F2, :] = w5aug
    slab[R_B1, 0:D_C1] = np.tile(p["b1"], L_CONV1)   # position-major conv1 bias
    slab[R_B2, 0:D_C2] = np.tile(p["b2"], L_CONV2)   # position-major conv2 bias
    slab[R_B3, 0:F1] = p["bfc1"]
    slab[R_B4, 0:F2] = p["bfc2"]
    slab[R_B5, :] = b5aug
    return jnp.asarray(slab, dtype=jnp.bfloat16)


# ----------------------------------------------------------------------------
# Per-call forward: reshape/pad input, single pallas_call, slice outputs.
# ----------------------------------------------------------------------------
@jax.jit
def cnn_dna_forward(x, slab):
    B = x.shape[0]
    # Position-major flatten of the (B, L, 4) channels-last input; pad batch to
    # a sublane-aligned 8 rows for an unmasked, lane-dense kernel block.
    xf = x.reshape(B, D_IN).astype(jnp.float32)
    Bp = max(8, -(-B // 8) * 8)
    xp = jnp.zeros((Bp, D_IN), jnp.float32).at[:B].set(xf)

    vmem = pl.BlockSpec(memory_space=pltpu.MemorySpace.VMEM)
    out = pl.pallas_call(
        _cnn_dna_kernel,
        out_shape=jax.ShapeDtypeStruct((Bp, SLAB_LANES), jnp.float32),
        in_specs=[vmem, vmem],
        out_specs=vmem,
    )(xp, slab)

    logits = out[:B, :N_CT]
    emb = out[:B, N_CT:N_CT + F2]
    return logits, emb


# ----------------------------------------------------------------------------
# Pure-JAX reference with PyTorch (NCL) semantics, for verification
# ----------------------------------------------------------------------------
def _ref_forward(x, params):
    def conv(h, w, b):
        pad = (w.shape[-1] - 1) // 2
        y = jax.lax.conv_general_dilated(
            h, w, window_strides=(1,), padding=[(pad, pad)],
            dimension_numbers=("NCH", "OIH", "NCH"))
        return y + b[None, :, None]

    def pool(h, kp):
        L = h.shape[-1]
        l_out = (L - kp) // kp + 1
        return jnp.stack(
            [jnp.max(h[:, :, i * kp:(i + 1) * kp], axis=-1) for i in range(l_out)],
            axis=-1)

    h = jnp.transpose(x, (0, 2, 1))                           # (B, 4, L)
    h = jnp.maximum(conv(h, params["w1"], params["b1"]), 0.0)
    h = pool(h, KP)
    h = jnp.maximum(conv(h, params["w2"], params["b2"]), 0.0)
    h = pool(h, KP)
    flat = h.reshape(h.shape[0], -1)                          # channel-major flatten
    z1 = jnp.maximum(flat @ params["wfc1"].T + params["bfc1"], 0.0)
    emb = jnp.maximum(z1 @ params["wfc2"].T + params["bfc2"], 0.0)
    logits = emb @ params["wfc3"].T + params["bfc3"]
    return logits, emb


def _init_params(key):
    ks = jax.random.split(key, 12)
    s = 0.1
    return {
        "w1": jax.random.normal(ks[0], (C1, 4, K1), jnp.float32) * s,
        "b1": jax.random.normal(ks[1], (C1,), jnp.float32) * s,
        "w2": jax.random.normal(ks[2], (C2, C1, K2), jnp.float32) * s,
        "b2": jax.random.normal(ks[3], (C2,), jnp.float32) * s,
        "wfc1": jax.random.normal(ks[4], (F1, FLATTEN), jnp.float32) * s,
        "bfc1": jax.random.normal(ks[5], (F1,), jnp.float32) * s,
        "wfc2": jax.random.normal(ks[6], (F2, F1), jnp.float32) * s,
        "bfc2": jax.random.normal(ks[7], (F2,), jnp.float32) * s,
        "wfc3": jax.random.normal(ks[8], (N_CT, F2), jnp.float32) * s,
        "bfc3": jax.random.normal(ks[9], (N_CT,), jnp.float32) * s,
    }


if __name__ == "__main__":
    root = jax.random.PRNGKey(0)
    k_params, k_x = jax.random.split(root)
    params = _init_params(k_params)
    x = jax.random.normal(k_x, (BATCH, KMER, 4), jnp.float32)   # (B, L, 4) module input

    # One-time host-side parameter folding + slab packing (off the call path).
    slab = pack_slab(params)

    logits, emb = cnn_dna_forward(x, slab)
    logits = jax.block_until_ready(logits)
    emb = jax.block_until_ready(emb)

    ref_logits, ref_emb = _ref_forward(x, params)
    # bf16 MXU operands (f32 accumulation) -> loosen tolerance vs f32 reference.
    assert bool(jnp.allclose(logits, ref_logits, atol=2e-2, rtol=2e-2)), "logits mismatch"
    assert bool(jnp.allclose(emb, ref_emb, atol=2e-2, rtol=2e-2)), "embedding mismatch"

    print("KERNEL_OK")
</pallas_src>

<mosaic_0001>
module attributes {stable_mosaic.version = 11 : i64} {
  func.func @_cnn_dna_kernel(%arg0: memref<8x36xf32, #tpu.memory_space<vmem>>, %arg1: memref<288x128xbf16, #tpu.memory_space<vmem>>, %arg2: memref<8x128xf32, #tpu.memory_space<vmem>>) attributes {dimension_semantics = [], scalar_prefetch = 0 : i64, scratch_operands = 0 : i64, tpu.core_type = #tpu.core_type<tc>} {
    %c0 = arith.constant 0 : index
    %c0_0 = arith.constant 0 : index
    %0 = vector.load %arg0[%c0, %c0_0] : memref<8x36xf32, #tpu.memory_space<vmem>>, vector<8x36xf32>
    %c0_1 = arith.constant 0 : index
    %c0_2 = arith.constant 0 : index
    %1 = vector.load %arg1[%c0_1, %c0_2] : memref<288x128xbf16, #tpu.memory_space<vmem>>, vector<36x72xbf16>
    %c48 = arith.constant 48 : index
    %c0_3 = arith.constant 0 : index
    %2 = vector.load %arg1[%c48, %c0_3] : memref<288x128xbf16, #tpu.memory_space<vmem>>, vector<64x64xbf16>
    %c112 = arith.constant 112 : index
    %c0_4 = arith.constant 0 : index
    %3 = vector.load %arg1[%c112, %c0_4] : memref<288x128xbf16, #tpu.memory_space<vmem>>, vector<48x32xbf16>
    %c160 = arith.constant 160 : index
    %c0_5 = arith.constant 0 : index
    %4 = vector.load %arg1[%c160, %c0_5] : memref<288x128xbf16, #tpu.memory_space<vmem>>, vector<32x16xbf16>
    %c192 = arith.constant 192 : index
    %c0_6 = arith.constant 0 : index
    %5 = vector.load %arg1[%c192, %c0_6] : memref<288x128xbf16, #tpu.memory_space<vmem>>, vector<16x128xbf16>
    %c208 = arith.constant 208 : index
    %c0_7 = arith.constant 0 : index
    %6 = vector.load %arg1[%c208, %c0_7] : memref<288x128xbf16, #tpu.memory_space<vmem>>, vector<1x72xbf16>
    %7 = arith.extf %6 : vector<1x72xbf16> to vector<1x72xf32>
    %c224 = arith.constant 224 : index
    %c0_8 = arith.constant 0 : index
    %8 = vector.load %arg1[%c224, %c0_8] : memref<288x128xbf16, #tpu.memory_space<vmem>>, vector<1x64xbf16>
    %9 = arith.extf %8 : vector<1x64xbf16> to vector<1x64xf32>
    %c240 = arith.constant 240 : index
    %c0_9 = arith.constant 0 : index
    %10 = vector.load %arg1[%c240, %c0_9] : memref<288x128xbf16, #tpu.memory_space<vmem>>, vector<1x32xbf16>
    %11 = arith.extf %10 : vector<1x32xbf16> to vector<1x32xf32>
    %c256 = arith.constant 256 : index
    %c0_10 = arith.constant 0 : index
    %12 = vector.load %arg1[%c256, %c0_10] : memref<288x128xbf16, #tpu.memory_space<vmem>>, vector<1x16xbf16>
    %13 = arith.extf %12 : vector<1x16xbf16> to vector<1x16xf32>
    %c272 = arith.constant 272 : index
    %c0_11 = arith.constant 0 : index
    %14 = vector.load %arg1[%c272, %c0_11] : memref<288x128xbf16, #tpu.memory_space<vmem>>, vector<1x128xbf16>
    %15 = arith.extf %14 : vector<1x128xbf16> to vector<1x128xf32>
    %16 = arith.truncf %0 : vector<8x36xf32> to vector<8x36xbf16>
    %cst = arith.constant dense<0.000000e+00> : vector<8x72xf32>
    %17 = tpu.matmul %16, %1, %cst {dimension_numbers = #tpu.dot_dimension_numbers<[1], [0], [0], [1], [0, 0, 1, 1], [], []>} : vector<8x36xbf16>, vector<36x72xbf16>, vector<8x72xf32> -> vector<8x72xf32>
    %18 = vector.broadcast %7 : vector<1x72xf32> to vector<8x72xf32>
    %19 = arith.addf %17, %18 : vector<8x72xf32>
    %cst_12 = arith.constant 0.000000e+00 : f32
    %20 = vector.broadcast %cst_12 : f32 to vector<8x72xf32>
    %21 = arith.maximumf %19, %20 : vector<8x72xf32>
    %22 = vector.extract_strided_slice %21 {offsets = [0, 0], sizes = [8, 64], strides = [1, 1]} : vector<8x72xf32> to vector<8x64xf32>
    %23 = vector.extract_strided_slice %21 {offsets = [0, 8], sizes = [8, 64], strides = [1, 1]} : vector<8x72xf32> to vector<8x64xf32>
    %24 = arith.maximumf %22, %23 : vector<8x64xf32>
    %25 = arith.truncf %24 : vector<8x64xf32> to vector<8x64xbf16>
    %cst_13 = arith.constant dense<0.000000e+00> : vector<8x64xf32>
    %26 = tpu.matmul %25, %2, %cst_13 {dimension_numbers = #tpu.dot_dimension_numbers<[1], [0], [0], [1], [0, 0, 1, 1], [], []>} : vector<8x64xbf16>, vector<64x64xbf16>, vector<8x64xf32> -> vector<8x64xf32>
    %27 = vector.broadcast %9 : vector<1x64xf32> to vector<8x64xf32>
    %28 = arith.addf %26, %27 : vector<8x64xf32>
    %cst_14 = arith.constant 0.000000e+00 : f32
    %29 = vector.broadcast %cst_14 : f32 to vector<8x64xf32>
    %30 = arith.maximumf %28, %29 : vector<8x64xf32>
    %31 = vector.extract_strided_slice %30 {offsets = [0, 0], sizes = [8, 48], strides = [1, 1]} : vector<8x64xf32> to vector<8x48xf32>
    %32 = vector.extract_strided_slice %30 {offsets = [0, 16], sizes = [8, 48], strides = [1, 1]} : vector<8x64xf32> to vector<8x48xf32>
    %33 = arith.maximumf %31, %32 : vector<8x48xf32>
    %34 = arith.truncf %33 : vector<8x48xf32> to vector<8x48xbf16>
    %cst_15 = arith.constant dense<0.000000e+00> : vector<8x32xf32>
    %35 = tpu.matmul %34, %3, %cst_15 {dimension_numbers = #tpu.dot_dimension_numbers<[1], [0], [0], [1], [0, 0, 1, 1], [], []>} : vector<8x48xbf16>, vector<48x32xbf16>, vector<8x32xf32> -> vector<8x32xf32>
    %36 = vector.broadcast %11 : vector<1x32xf32> to vector<8x32xf32>
    %37 = arith.addf %35, %36 : vector<8x32xf32>
    %cst_16 = arith.constant 0.000000e+00 : f32
    %38 = vector.broadcast %cst_16 : f32 to vector<8x32xf32>
    %39 = arith.maximumf %37, %38 : vector<8x32xf32>
    %40 = arith.truncf %39 : vector<8x32xf32> to vector<8x32xbf16>
    %cst_17 = arith.constant dense<0.000000e+00> : vector<8x16xf32>
    %41 = tpu.matmul %40, %4, %cst_17 {dimension_numbers = #tpu.dot_dimension_numbers<[1], [0], [0], [1], [0, 0, 1, 1], [], []>} : vector<8x32xbf16>, vector<32x16xbf16>, vector<8x16xf32> -> vector<8x16xf32>
    %42 = vector.broadcast %13 : vector<1x16xf32> to vector<8x16xf32>
    %43 = arith.addf %41, %42 : vector<8x16xf32>
    %cst_18 = arith.constant 0.000000e+00 : f32
    %44 = vector.broadcast %cst_18 : f32 to vector<8x16xf32>
    %45 = arith.maximumf %43, %44 : vector<8x16xf32>
    %46 = arith.truncf %45 : vector<8x16xf32> to vector<8x16xbf16>
    %cst_19 = arith.constant dense<0.000000e+00> : vector<8x128xf32>
    %47 = tpu.matmul %46, %5, %cst_19 {dimension_numbers = #tpu.dot_dimension_numbers<[1], [0], [0], [1], [0, 0, 1, 1], [], []>} : vector<8x16xbf16>, vector<16x128xbf16>, vector<8x128xf32> -> vector<8x128xf32>
    %48 = vector.broadcast %15 : vector<1x128xf32> to vector<8x128xf32>
    %49 = arith.addf %47, %48 : vector<8x128xf32>
    %c0_20 = arith.constant 0 : index
    %c0_21 = arith.constant 0 : index
    %50 = vector.load %arg2[%c0_20, %c0_21] : memref<8x128xf32, #tpu.memory_space<vmem>>, vector<8x128xf32>
    tpu.vector_store %arg2[%c0_20, %c0_21], %49 {strides = array<i32>} : memref<8x128xf32, #tpu.memory_space<vmem>>, vector<8x128xf32>,
    return
  }
}

</mosaic_0001>

<llo_original>
// kernel: cnn_dna_forward.1
$region0: #{cnn_dna_forward.1}
  #allocation0 [shape = 'u32[]', space=smem, size = 0x4, offset = 0x4, fixed_abs, tag = 'smem constant byte address 0x4 - core index']
  #allocation1 [shape = 'u32[144,128]{1,0:T(1,128)}', space=vmem, size = 0x12000, scoped, tag = 'internal scratch']
  %s0 = inlined_call_operand.vmem [shape: f32[8,36], index: 0, kind: input, shape index: {}]
  %s1 = inlined_call_operand.hbm [shape: bf16[288,128], index: 1, kind: input, shape index: {}]
  %s2 = inlined_call_operand.vmem [shape: f32[8,128], index: 2, kind: output, shape index: {}]
  %s3 = sld [smem:[#allocation0]]
  $region22: #{cnn_dna_forward.1} parent=0
    _
  %s5 = ssub.s32 1, %s3
  %s6 = scalar_select 0, %s5, %s3
  $region1: #{cnn_dna_forward.1} parent=0
    #allocation2 [shape = 'u8[73728]{0}', space=vmem, size = 0x12000, scoped, tag = 'input window, operand 1, single buffered']
    #allocation3 [shape = 's32[1]{0}', space=sflag, size = 0x4, scoped, tag = 'scoped memory for cnn_dna_forward.1']
    %7 = vsyncpa [#allocation3], 0
    // Predicated region
    $region2: #{cnn_dna_forward.1} parent=1 // pred_check
      _
    $region3: #{cnn_dna_forward.1} parent=1 // pred_check_branch
      %9 = sbr.rel (0) target = $region5
    $region4: #{cnn_dna_forward.1} parent=1 // pred_region
      _
    $region5: #{cnn_dna_forward.1} parent=1 // pred_fallthru
      _
    // Predicated region
    $region6: #{cnn_dna_forward.1} parent=1 // pred_check
      _
    $region7: #{cnn_dna_forward.1} parent=1 // pred_check_branch
      %11 = sbr.rel (0) target = $region9
    $region8: #{cnn_dna_forward.1} parent=1 // pred_region
      %s13 = ssub.s32 2304, 2304
      %14 = vsyncadd [#allocation3], %s13
      %s15 = sshll.u32 [#allocation2], 4
      %s16 = int_to_ptr.vmem [resolvable:$true] %s15
      %21 = dma.hbm_to_vmem [thread:$0]  %s1, 2304, %s16, [#allocation3], 64, 64, 4
    $region9: #{cnn_dna_forward.1} parent=1 // pred_fallthru
      _
    // Predicated region
    $region10: #{cnn_dna_forward.1} parent=1 // pred_check
      _
    $region11: #{cnn_dna_forward.1} parent=1 // pred_check_branch
      %23 = sbr.rel (0) target = $region13
    $region12: #{cnn_dna_forward.1} parent=1 // pred_region
      %24 = dma.done [#allocation3], 2304
    $region13: #{cnn_dna_forward.1} parent=1 // pred_fallthru
      _
    %v26 = vld [vmem:[%s0] sm:$0xff]
    %v27 = vld [vmem:[#allocation2] sm:$0xf]
    %v28 = vld [vmem:[#allocation2 + $0x4] sm:$0xf]
    %v29 = vld [vmem:[#allocation2 + $0x8] sm:$0xf]
    %v30 = vld [vmem:[#allocation2 + $0xc] sm:$0xf]
    %v31 = vld [vmem:[#allocation2 + $0x10] sm:$0x3]
    %v32 = vld [vmem:[#allocation2 + $0x18] sm:$0xf]
    %v33 = vld [vmem:[#allocation2 + $0x1c] sm:$0xf]
    %v34 = vld [vmem:[#allocation2 + $0x20] sm:$0xf]
    %v35 = vld [vmem:[#allocation2 + $0x24] sm:$0xf]
    %v36 = vld [vmem:[#allocation2 + $0x28] sm:$0xf]
    %v37 = vld [vmem:[#allocation2 + $0x2c] sm:$0xf]
    %v38 = vld [vmem:[#allocation2 + $0x30] sm:$0xf]
    %v39 = vld [vmem:[#allocation2 + $0x34] sm:$0xf]
    %v40 = vld [vmem:[#allocation2 + $0x38] sm:$0xf]
    %v41 = vld [vmem:[#allocation2 + $0x3c] sm:$0xf]
    %v42 = vld [vmem:[#allocation2 + $0x40] sm:$0xf]
    %v43 = vld [vmem:[#allocation2 + $0x44] sm:$0xf]
    %v44 = vld [vmem:[#allocation2 + $0x48] sm:$0xf]
    %v45 = vld [vmem:[#allocation2 + $0x4c] sm:$0xf]
    %v46 = vld [vmem:[#allocation2 + $0x50] sm:$0xf]
    %v47 = vld [vmem:[#allocation2 + $0x54] sm:$0xf]
    %v48 = vld [vmem:[#allocation2 + $0x58] sm:$0xf]
    %v49 = vld [vmem:[#allocation2 + $0x5c] sm:$0xf]
    %v50 = vld [vmem:[#allocation2 + $0x60] sm:$0xf]
    %v51 = vld [vmem:[#allocation2 + $0x64] sm:$0xf]
    %v52 = vld [vmem:[#allocation2 + $0x68] sm:$0x1]
    %v53 = vunpack.c.l.bf16 %v52
    %v54 = vld [vmem:[#allocation2 + $0x70] sm:$0x1]
    %v55 = vunpack.c.l.bf16 %v54
    %v56 = vld [vmem:[#allocation2 + $0x78] sm:$0x1]
    %v57 = vunpack.c.l.bf16 %v56
    %v58 = vld [vmem:[#allocation2 + $0x80] sm:$0x1]
    %v59 = vunpack.c.l.bf16 %v58
    %v60 = vld [vmem:[#allocation2 + $0x88] sm:$0x1]
    %v61 = vunpack.c.l.bf16 %v60
    %v62 = vpack.c.bf16 %v26, %v26
    %v63 = vlaneseq
    %v64 = vshrl.u32 %v63, 7
    %v65 = vsub.s32 0, %v64
    %v66 = vrot.slane %v53, %v65
    %v72 = vunpack.c.l.b16 %v27
    %v73 = vunpack.c.l.b16 %v28
    %v74 = vunpack.c.l.b16 %v29
    %v75 = vunpack.c.l.b16 %v30
    %v76 = vunpack.c.l.b16 %v31
    %v77 = vpack.c.b16 %v73, %v72
    %v78 = vpack.c.b16 %v75, %v74
    %v79 = vpack.c.b16 %v76, %v76
    %vm82 = vcmask 293888
    %v84 = vsel %vm82, %v62, 0
    %vm86 = vcmask 1041408
    %v88 = vsel %vm86, %v79, 0
    %90 = vmatprep.subr.bf16.mxu0 0
    %91 = vmatpush1.bf16.msra.mxu0 %v77
    %92 = vmatprep.subr.bf16.mxu0 0
    %93 = vmatpush1.bf16.msra.mxu0 %v78
    %94 = vmatprep.subr.bf16.mxu0 0
    %95 = vmatpush1.bf16.msra.mxu0 %v88
    %96 = vmatprep.subr.bf16.mxu0 0
    %97 = vmatpush1.bf16.msra.mxu0 0
    %98 = vmatprep.subr.bf16.mxu0 0
    %99 = vmatpush1.bf16.msra.mxu0 0
    %100 = vmatprep.subr.bf16.mxu0 0
    %101 = vmatpush1.bf16.msra.mxu0 0
    %102 = vmatprep.subr.bf16.mxu0 0
    %103 = vmatpush1.bf16.msra.mxu0 0
    %104 = vmatprep.subr.bf16.mxu0 0
    %105 = vmatpush1.bf16.msra.mxu0 0
    %106 = vmatprep.subr.bf16.mxu0 0
    %107 = vmatpush1.bf16.msra.mxu0 0
    %108 = vmatprep.subr.bf16.mxu0 0
    %109 = vmatpush1.bf16.msra.mxu0 0
    %110 = vmatprep.subr.bf16.mxu0 0
    %111 = vmatpush1.bf16.msra.mxu0 0
    %112 = vmatprep.subr.bf16.mxu0 0
    %113 = vmatpush1.bf16.msra.mxu0 0
    %114 = vmatprep.subr.bf16.mxu0 0
    %115 = vmatpush1.bf16.msra.mxu0 0
    %116 = vmatprep.subr.bf16.mxu0 0
    %117 = vmatpush1.bf16.msra.mxu0 0
    %118 = vmatprep.subr.bf16.mxu0 0
    %119 = vmatpush1.bf16.msra.mxu0 0
    %120 = vmatprep.subr.bf16.mxu0 0
    %121 = vmatpush1.bf16.msra.mxu0 0
    %122 = vmatprep.mubr.bf16.mxu0 0
    %123 = vmatmul.mubr.bf16.gmra.mrb[0].mxu0 %v84
    %v124 = vpop.f32.mrb[0].mxu0
    %v125 = vadd.f32 %v66, %v124
    %v126 = vpop.f32.mrb[0].mxu0
    %v127 = vpop.f32.mrb[0].mxu0
    %v128 = vpop.f32.mrb[0].mxu0
    %129 = vdwg.mxu0
    %v130 = vmax.f32 %v125, 0.0
    %132 = vrot.lane.b32.xlu0 %v130, 120
    %v133 = vpop.permute.xlu0 %132
    %v135 = vmax.f32 %v130, %v133
    %v136 = vpack.c.bf16 %v135, %v135
    %v137 = vlaneseq
    %v138 = vshrl.u32 %v137, 7
    %v139 = vsub.s32 0, %v138
    %v140 = vrot.slane %v55, %v139
    %v149 = vunpack.c.l.b16 %v32
    %v150 = vunpack.c.l.b16 %v33
    %v151 = vunpack.c.l.b16 %v34
    %v152 = vunpack.c.l.b16 %v35
    %v153 = vunpack.c.l.b16 %v36
    %v154 = vunpack.c.l.b16 %v37
    %v155 = vunpack.c.l.b16 %v38
    %v156 = vunpack.c.l.b16 %v39
    %v157 = vpack.c.b16 %v150, %v149
    %v158 = vpack.c.b16 %v152, %v151
    %v159 = vpack.c.b16 %v154, %v153
    %v160 = vpack.c.b16 %v156, %v155
    %vm165 = vcmask 523264
    %v167 = vsel %vm165, %v136, 0
    %169 = vmatprep.subr.bf16.mxu0 0
    %170 = vmatpush1.bf16.msra.mxu0 %v157
    %171 = vmatprep.subr.bf16.mxu0 0
    %172 = vmatpush1.bf16.msra.mxu0 %v158
    %173 = vmatprep.subr.bf16.mxu0 0
    %174 = vmatpush1.bf16.msra.mxu0 %v159
    %175 = vmatprep.subr.bf16.mxu0 0
    %176 = vmatpush1.bf16.msra.mxu0 %v160
    %177 = vmatprep.subr.bf16.mxu0 0
    %178 = vmatpush1.bf16.msra.mxu0 0
    %179 = vmatprep.subr.bf16.mxu0 0
    %180 = vmatpush1.bf16.msra.mxu0 0
    %181 = vmatprep.subr.bf16.mxu0 0
    %182 = vmatpush1.bf16.msra.mxu0 0
    %183 = vmatprep.subr.bf16.mxu0 0
    %184 = vmatpush1.bf16.msra.mxu0 0
    %185 = vmatprep.subr.bf16.mxu0 0
    %186 = vmatpush1.bf16.msra.mxu0 0
    %187 = vmatprep.subr.bf16.mxu0 0
    %188 = vmatpush1.bf16.msra.mxu0 0
    %189 = vmatprep.subr.bf16.mxu0 0
    %190 = vmatpush1.bf16.msra.mxu0 0
    %191 = vmatprep.subr.bf16.mxu0 0
    %192 = vmatpush1.bf16.msra.mxu0 0
    %193 = vmatprep.subr.bf16.mxu0 0
    %194 = vmatpush1.bf16.msra.mxu0 0
    %195 = vmatprep.subr.bf16.mxu0 0
    %196 = vmatpush1.bf16.msra.mxu0 0
    %197 = vmatprep.subr.bf16.mxu0 0
    %198 = vmatpush1.bf16.msra.mxu0 0
    %199 = vmatprep.subr.bf16.mxu0 0
    %200 = vmatpush1.bf16.msra.mxu0 0
    %201 = vmatprep.mubr.bf16.mxu0 0
    %202 = vmatmul.mubr.bf16.gmra.mrb[0].mxu0 %v167
    %v203 = vpop.f32.mrb[0].mxu0
    %v204 = vadd.f32 %v140, %v203
    %v205 = vpop.f32.mrb[0].mxu0
    %v206 = vpop.f32.mrb[0].mxu0
    %v207 = vpop.f32.mrb[0].mxu0
    %208 = vdwg.mxu0
    %v209 = vmax.f32 %v204, 0.0
    %211 = vrot.lane.b32.xlu0 %v209, 112
    %v212 = vpop.permute.xlu0 %211
    %v214 = vmax.f32 %v209, %v212
    %v215 = vpack.c.bf16 %v214, %v214
    %v216 = vlaneseq
    %v217 = vshrl.u32 %v216, 7
    %v218 = vsub.s32 0, %v217
    %v219 = vrot.slane %v57, %v218
    %v226 = vunpack.c.l.b16 %v40
    %v227 = vunpack.c.l.b16 %v41
    %v228 = vunpack.c.l.b16 %v42
    %v229 = vunpack.c.l.b16 %v43
    %v230 = vunpack.c.l.b16 %v44
    %v231 = vunpack.c.l.b16 %v45
    %v232 = vpack.c.b16 %v227, %v226
    %v233 = vpack.c.b16 %v229, %v228
    %v234 = vpack.c.b16 %v231, %v230
    %vm238 = vcmask 392192
    %v240 = vsel %vm238, %v215, 0
    %242 = vmatprep.subr.bf16.mxu0 0
    %243 = vmatpush1.bf16.msra.mxu0 %v232
    %244 = vmatprep.subr.bf16.mxu0 0
    %245 = vmatpush1.bf16.msra.mxu0 %v233
    %246 = vmatprep.subr.bf16.mxu0 0
    %247 = vmatpush1.bf16.msra.mxu0 %v234
    %248 = vmatprep.subr.bf16.mxu0 0
    %249 = vmatpush1.bf16.msra.mxu0 0
    %250 = vmatprep.subr.bf16.mxu0 0
    %251 = vmatpush1.bf16.msra.mxu0 0
    %252 = vmatprep.subr.bf16.mxu0 0
    %253 = vmatpush1.bf16.msra.mxu0 0
    %254 = vmatprep.subr.bf16.mxu0 0
    %255 = vmatpush1.bf16.msra.mxu0 0
    %256 = vmatprep.subr.bf16.mxu0 0
    %257 = vmatpush1.bf16.msra.mxu0 0
    %258 = vmatprep.subr.bf16.mxu0 0
    %259 = vmatpush1.bf16.msra.mxu0 0
    %260 = vmatprep.subr.bf16.mxu0 0
    %261 = vmatpush1.bf16.msra.mxu0 0
    %262 = vmatprep.subr.bf16.mxu0 0
    %263 = vmatpush1.bf16.msra.mxu0 0
    %264 = vmatprep.subr.bf16.mxu0 0
    %265 = vmatpush1.bf16.msra.mxu0 0
    %266 = vmatprep.subr.bf16.mxu0 0
    %267 = vmatpush1.bf16.msra.mxu0 0
    %268 = vmatprep.subr.bf16.mxu0 0
    %269 = vmatpush1.bf16.msra.mxu0 0
    %270 = vmatprep.subr.bf16.mxu0 0
    %271 = vmatpush1.bf16.msra.mxu0 0
    %272 = vmatprep.subr.bf16.mxu0 0
    %273 = vmatpush1.bf16.msra.mxu0 0
    %274 = vmatprep.mubr.bf16.mxu0 0
    %275 = vmatmul.mubr.bf16.gmra.mrb[0].mxu0 %v240
    %v276 = vpop.f32.mrb[0].mxu0
    %v277 = vadd.f32 %v219, %v276
    %v278 = vpop.f32.mrb[0].mxu0
    %v279 = vpop.f32.mrb[0].mxu0
    %v280 = vpop.f32.mrb[0].mxu0
    %281 = vdwg.mxu0
    %v282 = vmax.f32 %v277, 0.0
    %v283 = vpack.c.bf16 %v282, %v282
    %v284 = vlaneseq
    %v285 = vshrl.u32 %v284, 7
    %v286 = vsub.s32 0, %v285
    %v287 = vrot.slane %v59, %v286
    %v292 = vunpack.c.l.b16 %v46
    %v293 = vunpack.c.l.b16 %v47
    %v294 = vunpack.c.l.b16 %v48
    %v295 = vunpack.c.l.b16 %v49
    %v296 = vpack.c.b16 %v293, %v292
    %v297 = vpack.c.b16 %v295, %v294
    %vm300 = vcmask 261120
    %v302 = vsel %vm300, %v283, 0
    %304 = vmatprep.subr.bf16.mxu0 0
    %305 = vmatpush1.bf16.msra.mxu0 %v296
    %306 = vmatprep.subr.bf16.mxu0 0
    %307 = vmatpush1.bf16.msra.mxu0 %v297
    %308 = vmatprep.subr.bf16.mxu0 0
    %309 = vmatpush1.bf16.msra.mxu0 0
    %310 = vmatprep.subr.bf16.mxu0 0
    %311 = vmatpush1.bf16.msra.mxu0 0
    %312 = vmatprep.subr.bf16.mxu0 0
    %313 = vmatpush1.bf16.msra.mxu0 0
    %314 = vmatprep.subr.bf16.mxu0 0
    %315 = vmatpush1.bf16.msra.mxu0 0
    %316 = vmatprep.subr.bf16.mxu0 0
    %317 = vmatpush1.bf16.msra.mxu0 0
    %318 = vmatprep.subr.bf16.mxu0 0
    %319 = vmatpush1.bf16.msra.mxu0 0
    %320 = vmatprep.subr.bf16.mxu0 0
    %321 = vmatpush1.bf16.msra.mxu0 0
    %322 = vmatprep.subr.bf16.mxu0 0
    %323 = vmatpush1.bf16.msra.mxu0 0
    %324 = vmatprep.subr.bf16.mxu0 0
    %325 = vmatpush1.bf16.msra.mxu0 0
    %326 = vmatprep.subr.bf16.mxu0 0
    %327 = vmatpush1.bf16.msra.mxu0 0
    %328 = vmatprep.subr.bf16.mxu0 0
    %329 = vmatpush1.bf16.msra.mxu0 0
    %330 = vmatprep.subr.bf16.mxu0 0
    %331 = vmatpush1.bf16.msra.mxu0 0
    %332 = vmatprep.subr.bf16.mxu0 0
    %333 = vmatpush1.bf16.msra.mxu0 0
    %334 = vmatprep.subr.bf16.mxu0 0
    %335 = vmatpush1.bf16.msra.mxu0 0
    %336 = vmatprep.mubr.bf16.mxu0 0
    %337 = vmatmul.mubr.bf16.gmra.mrb[0].mxu0 %v302
    %v338 = vpop.f32.mrb[0].mxu0
    %v339 = vadd.f32 %v287, %v338
    %v340 = vpop.f32.mrb[0].mxu0
    %v341 = vpop.f32.mrb[0].mxu0
    %v342 = vpop.f32.mrb[0].mxu0
    %343 = vdwg.mxu0
    %v344 = vmax.f32 %v339, 0.0
    %v345 = vpack.c.bf16 %v344, %v344
    %v346 = vlaneseq
    %v347 = vshrl.u32 %v346, 7
    %v348 = vsub.s32 0, %v347
    %v349 = vrot.slane %v61, %v348
    %v352 = vunpack.c.l.b16 %v50
    %v353 = vunpack.c.l.b16 %v51
    %v354 = vpack.c.b16 %v353, %v352
    %vm356 = vcmask 130048
    %v358 = vsel %vm356, %v345, 0
    %360 = vmatprep.subr.bf16.mxu0 0
    %361 = vmatpush1.bf16.msra.mxu0 %v354
    %362 = vmatprep.subr.bf16.mxu0 0
    %363 = vmatpush1.bf16.msra.mxu0 0
    %364 = vmatprep.subr.bf16.mxu0 0
    %365 = vmatpush1.bf16.msra.mxu0 0
    %366 = vmatprep.subr.bf16.mxu0 0
    %367 = vmatpush1.bf16.msra.mxu0 0
    %368 = vmatprep.subr.bf16.mxu0 0
    %369 = vmatpush1.bf16.msra.mxu0 0
    %370 = vmatprep.subr.bf16.mxu0 0
    %371 = vmatpush1.bf16.msra.mxu0 0
    %372 = vmatprep.subr.bf16.mxu0 0
    %373 = vmatpush1.bf16.msra.mxu0 0
    %374 = vmatprep.subr.bf16.mxu0 0
    %375 = vmatpush1.bf16.msra.mxu0 0
    %376 = vmatprep.subr.bf16.mxu0 0
    %377 = vmatpush1.bf16.msra.mxu0 0
    %378 = vmatprep.subr.bf16.mxu0 0
    %379 = vmatpush1.bf16.msra.mxu0 0
    %380 = vmatprep.subr.bf16.mxu0 0
    %381 = vmatpush1.bf16.msra.mxu0 0
    %382 = vmatprep.subr.bf16.mxu0 0
    %383 = vmatpush1.bf16.msra.mxu0 0
    %384 = vmatprep.subr.bf16.mxu0 0
    %385 = vmatpush1.bf16.msra.mxu0 0
    %386 = vmatprep.subr.bf16.mxu0 0
    %387 = vmatpush1.bf16.msra.mxu0 0
    %388 = vmatprep.subr.bf16.mxu0 0
    %389 = vmatpush1.bf16.msra.mxu0 0
    %390 = vmatprep.subr.bf16.mxu0 0
    %391 = vmatpush1.bf16.msra.mxu0 0
    %392 = vmatprep.mubr.bf16.mxu0 0
    %393 = vmatmul.mubr.bf16.gmra.mrb[0].mxu0 %v358
    %v394 = vpop.f32.mrb[0].mxu0
    %v395 = vadd.f32 %v349, %v394
    %v396 = vpop.f32.mrb[0].mxu0
    %v397 = vpop.f32.mrb[0].mxu0
    %v398 = vpop.f32.mrb[0].mxu0
    %399 = vdwg.mxu0
    %400 = vst [vmem:[%s2] sm:$0xff] %v395
    // Predicated region
    $region14: #{cnn_dna_forward.1} parent=1 // pred_check
      _
    $region15: #{cnn_dna_forward.1} parent=1 // pred_check_branch
      %402 = sbr.rel (0) target = $region17
    $region16: #{cnn_dna_forward.1} parent=1 // pred_region
      _
    $region17: #{cnn_dna_forward.1} parent=1 // pred_fallthru
      _
    // Predicated region
    $region18: #{cnn_dna_forward.1} parent=1 // pred_check
      _
    $region19: #{cnn_dna_forward.1} parent=1 // pred_check_branch
      %404 = sbr.rel (0) target = $region21
    $region20: #{cnn_dna_forward.1} parent=1 // pred_region
      _
    $region21: #{cnn_dna_forward.1} parent=1 // pred_fallthru
      _
    %405 = vsyncpa [#allocation3], 1

</llo_original>
